<compile_context>
chip_gen: v6e
topology: v6e:2x2x1
jax: 0.10.0
libtpu: 0.0.40
codegen_flags: <defaults>
</compile_context>

<pallas_src>
import jax
import jax.numpy as jnp
from jax.experimental import pallas as pl
from jax.experimental.pallas import tpu as pltpu


def dueling_net_kernel(xT_ref, w1_ref, b1_ref, w2_ref, b2_ref,
                       wh_ref, bh_ref, out_ref):
    # Batch lives on the lane axis everywhere: [features, tb].
    xT = xT_ref[...]                                                  # [n_in, tb]

    # fc1 + relu  (bf16 MXU, f32 accumulate, f32 bias/relu)
    h1 = jnp.dot(w1_ref[...], xT, preferred_element_type=jnp.float32) + b1_ref[...]
    h1 = jnp.maximum(h1, 0.0).astype(w2_ref.dtype)                    # [n_mid, tb]

    # fc2 + relu
    h2 = jnp.dot(w2_ref[...], h1, preferred_element_type=jnp.float32) + b2_ref[...]
    h2 = jnp.maximum(h2, 0.0).astype(wh_ref.dtype)                    # [n_mid, tb]

    # fused dueling head (combine already folded into wh/bh at prep time)
    out = jnp.dot(wh_ref[...], h2, preferred_element_type=jnp.float32) + bh_ref[...]
    out_ref[...] = out.astype(out_ref.dtype)                          # [n_out, tb]


def prep_params(p, compute_dtype=jnp.bfloat16):
    """One-time re-layout of torch-shaped params (hoisted out of the forward).

    Keeps torch (out, in) weight layout (batch-in-lanes compute), reshapes
    biases to column vectors, and folds the dueling combine
        out = val + adv - mean(adv)
    directly into the head weights/bias (exact linear-algebra identity).
    Weights are cast to `compute_dtype` (bf16 by default); biases stay f32.
    """
    f32 = jnp.float32
    w1 = jnp.asarray(p["w1"], f32)                        # [n_mid, n_in]
    b1 = jnp.asarray(p["b1"], f32).reshape(-1, 1)         # [n_mid, 1]
    w2 = jnp.asarray(p["w2"], f32)                        # [n_mid, n_mid]
    b2 = jnp.asarray(p["b2"], f32).reshape(-1, 1)         # [n_mid, 1]
    w_adv = jnp.asarray(p["w_adv"], f32)                  # [n_out, n_mid]
    b_adv = jnp.asarray(p["b_adv"], f32)                  # [n_out]
    w_v = jnp.asarray(p["w_v"], f32)                      # [1, n_mid]
    b_v = jnp.asarray(p["b_v"], f32)                      # [1]

    # Fold dueling combine into the head (done once, in f32).
    wh = w_v + w_adv - jnp.mean(w_adv, axis=0, keepdims=True)     # [n_out, n_mid]
    bh = (b_v + b_adv - jnp.mean(b_adv)).reshape(-1, 1)           # [n_out, 1]

    return (w1.astype(compute_dtype), b1,
            w2.astype(compute_dtype), b2,
            wh.astype(compute_dtype), bh)


def dueling_net(x, prepped, *, tile_b=1024):
    """x: [B, n_in] f32; prepped: output of prep_params(). Returns [B, n_out] f32."""
    w1, b1, w2, b2, wh, bh = prepped
    compute_dtype = w1.dtype
    B, n_in = x.shape
    n_mid = w1.shape[0]
    n_out = wh.shape[0]

    LANE = 128
    # Batch tile on the lane axis: multiple of 128, as large as tile_b allows,
    # but keep >= 2 grid steps when the batch has >= 2 lane-chunks so the
    # "parallel" axis can split across v7x's two TensorCores.
    b_lanes = pl.cdiv(B, LANE)
    tb_lanes = max(1, min(tile_b // LANE, b_lanes))
    if b_lanes >= 2 and tb_lanes >= b_lanes:
        tb_lanes = (b_lanes + 1) // 2
    tb = tb_lanes * LANE
    b_pad = pl.cdiv(B, tb) * tb

    # Pad batch, flip to batch-in-lanes, cast activations to compute dtype.
    x_p = x if b_pad == B else jnp.pad(x, ((0, b_pad - B), (0, 0)))
    xT = x_p.T.astype(compute_dtype)                               # [n_in, b_pad]

    resident = lambda i: (0, 0)   # weights/biases: same block every step -> stay in VMEM

    out_t = pl.pallas_call(
        dueling_net_kernel,
        out_shape=jax.ShapeDtypeStruct((n_out, b_pad), jnp.float32),
        grid=(b_pad // tb,),
        in_specs=[
            pl.BlockSpec((n_in, tb), lambda i: (0, i)),     # x^T: tiled over batch lanes
            pl.BlockSpec((n_mid, n_in), resident),          # w1 (torch layout)
            pl.BlockSpec((n_mid, 1), resident),             # b1
            pl.BlockSpec((n_mid, n_mid), resident),         # w2
            pl.BlockSpec((n_mid, 1), resident),             # b2
            pl.BlockSpec((n_out, n_mid), resident),         # fused head weight
            pl.BlockSpec((n_out, 1), resident),             # fused head bias
        ],
        out_specs=pl.BlockSpec((n_out, tb), lambda i: (0, i)),     # lane-dense stores
        compiler_params=pltpu.CompilerParams(
            dimension_semantics=("parallel",),              # use both TCs on v7x
            vmem_limit_bytes=32 * 1024 * 1024,              # safe on v7x's 64 MiB
        ),
    )(xT, w1, b1, w2, b2, wh, bh)

    return out_t[:, :B].T                                    # back to [B, n_out]


def init_params(key, n_in, n_mid, n_out):
    """Deterministic synthetic parameters with torch nn.Linear shapes."""
    ks = jax.random.split(key, 8)

    def unif(k, shape, fan_in):
        bound = 1.0 / jnp.sqrt(fan_in)
        return jax.random.uniform(k, shape, jnp.float32, -bound, bound)

    return {
        "w1":    unif(ks[0], (n_mid, n_in), n_in),
        "b1":    unif(ks[1], (n_mid,), n_in),
        "w2":    unif(ks[2], (n_mid, n_mid), n_mid),
        "b2":    unif(ks[3], (n_mid,), n_mid),
        "w_adv": unif(ks[4], (n_out, n_mid), n_mid),
        "b_adv": unif(ks[5], (n_out,), n_mid),
        "w_v":   unif(ks[6], (1, n_mid), n_mid),
        "b_v":   unif(ks[7], (1,), n_mid),
    }


def reference_forward(x, p):
    """Pure-JAX f32 reference mirroring the PyTorch forward (highest precision)."""
    hi = jax.lax.Precision.HIGHEST
    h1 = jax.nn.relu(jnp.dot(x, p["w1"].T, precision=hi) + p["b1"])
    h2 = jax.nn.relu(jnp.dot(h1, p["w2"].T, precision=hi) + p["b2"])
    adv = jnp.dot(h2, p["w_adv"].T, precision=hi) + p["b_adv"]
    val = jnp.dot(h2, p["w_v"].T, precision=hi) + p["b_v"]          # [B, 1]
    return val + adv - adv.mean(axis=1, keepdims=True)


if __name__ == "__main__":
    n_in, n_mid, n_out = 16, 32, 4
    key = jax.random.PRNGKey(0)
    k_x, k_p, k_x2 = jax.random.split(key, 3)
    params = init_params(k_p, n_in, n_mid, n_out)

    # --- main demo: B=64, bf16 compute (recommended path) -------------------
    B = 64
    x = jax.random.normal(k_x, (B, n_in), jnp.float32)
    prepped_bf16 = prep_params(params, compute_dtype=jnp.bfloat16)
    forward = jax.jit(lambda xb: dueling_net(xb, prepped_bf16, tile_b=1024))
    out = jax.block_until_ready(forward(x))
    ref = reference_forward(x, params)
    assert out.shape == (B, n_out)
    assert jnp.allclose(out, ref, atol=5e-2, rtol=5e-2), (
        f"bf16 mismatch vs reference (max abs err {jnp.max(jnp.abs(out - ref))})")

    # --- f32 compute path: strict check ------------------------------------
    prepped_f32 = prep_params(params, compute_dtype=jnp.float32)
    out_f32 = jax.block_until_ready(
        jax.jit(lambda xb: dueling_net(xb, prepped_f32, tile_b=1024))(x))
    assert jnp.allclose(out_f32, ref, atol=1e-4, rtol=1e-4), (
        f"f32 mismatch vs reference (max abs err {jnp.max(jnp.abs(out_f32 - ref))})")

    # --- multi-tile + padding path: B=300 -> tb=256, grid=2, padded to 512 --
    B2 = 300
    x2 = jax.random.normal(k_x2, (B2, n_in), jnp.float32)
    out2 = jax.block_until_ready(
        jax.jit(lambda xb: dueling_net(xb, prepped_bf16, tile_b=1024))(x2))
    ref2 = reference_forward(x2, params)
    assert out2.shape == (B2, n_out)
    assert jnp.allclose(out2, ref2, atol=5e-2, rtol=5e-2), (
        f"multi-tile mismatch vs reference (max abs err {jnp.max(jnp.abs(out2 - ref2))})")

    print("KERNEL_OK")
</pallas_src>

<mosaic_0001>
module attributes {stable_mosaic.version = 11 : i64} {
  func.func @dueling_net_kernel(%arg0: i32, %arg1: memref<16x128xbf16, #tpu.memory_space<vmem>>, %arg2: memref<32x16xbf16, #tpu.memory_space<vmem>>, %arg3: memref<32x1xf32, #tpu.memory_space<vmem>>, %arg4: memref<32x32xbf16, #tpu.memory_space<vmem>>, %arg5: memref<32x1xf32, #tpu.memory_space<vmem>>, %arg6: memref<4x32xbf16, #tpu.memory_space<vmem>>, %arg7: memref<4x1xf32, #tpu.memory_space<vmem>>, %arg8: memref<4x128xf32, #tpu.memory_space<vmem>>) attributes {dimension_semantics = [#tpu.dimension_semantics<parallel>], iteration_bounds = array<i64: 1>, scalar_prefetch = 0 : i64, scratch_operands = 0 : i64, tpu.core_type = #tpu.core_type<tc>, window_params = [{transform_indices = @transform_0, window_bounds = array<i64: 16, 128>}, {pipeline_mode = #tpu.pipeline_mode<synchronous>, transform_indices = @transform_1, window_bounds = array<i64: 32, 16>}, {pipeline_mode = #tpu.pipeline_mode<synchronous>, transform_indices = @transform_2, window_bounds = array<i64: 32, 1>}, {pipeline_mode = #tpu.pipeline_mode<synchronous>, transform_indices = @transform_3, window_bounds = array<i64: 32, 32>}, {pipeline_mode = #tpu.pipeline_mode<synchronous>, transform_indices = @transform_4, window_bounds = array<i64: 32, 1>}, {pipeline_mode = #tpu.pipeline_mode<synchronous>, transform_indices = @transform_5, window_bounds = array<i64: 4, 32>}, {pipeline_mode = #tpu.pipeline_mode<synchronous>, transform_indices = @transform_6, window_bounds = array<i64: 4, 1>}, {transform_indices = @transform_7, window_bounds = array<i64: 4, 128>}]} {
    %c0 = arith.constant 0 : index
    %c0_0 = arith.constant 0 : index
    %0 = vector.load %arg1[%c0, %c0_0] : memref<16x128xbf16, #tpu.memory_space<vmem>>, vector<16x128xbf16>
    %c0_1 = arith.constant 0 : index
    %c0_2 = arith.constant 0 : index
    %1 = vector.load %arg2[%c0_1, %c0_2] : memref<32x16xbf16, #tpu.memory_space<vmem>>, vector<32x16xbf16>
    %cst = arith.constant dense<0.000000e+00> : vector<32x128xf32>
    %2 = tpu.matmul %1, %0, %cst {dimension_numbers = #tpu.dot_dimension_numbers<[1], [0], [0], [1], [0, 0, 1, 1], [], []>} : vector<32x16xbf16>, vector<16x128xbf16>, vector<32x128xf32> -> vector<32x128xf32>
    %c0_3 = arith.constant 0 : index
    %c0_4 = arith.constant 0 : index
    %3 = vector.load %arg3[%c0_3, %c0_4] : memref<32x1xf32, #tpu.memory_space<vmem>>, vector<32x1xf32>
    %4 = vector.broadcast %3 : vector<32x1xf32> to vector<32x128xf32>
    %5 = arith.addf %2, %4 : vector<32x128xf32>
    %cst_5 = arith.constant 0.000000e+00 : f32
    %6 = vector.broadcast %cst_5 : f32 to vector<32x128xf32>
    %7 = arith.maximumf %5, %6 : vector<32x128xf32>
    %8 = arith.truncf %7 : vector<32x128xf32> to vector<32x128xbf16>
    %c0_6 = arith.constant 0 : index
    %c0_7 = arith.constant 0 : index
    %9 = vector.load %arg4[%c0_6, %c0_7] : memref<32x32xbf16, #tpu.memory_space<vmem>>, vector<32x32xbf16>
    %cst_8 = arith.constant dense<0.000000e+00> : vector<32x128xf32>
    %10 = tpu.matmul %9, %8, %cst_8 {dimension_numbers = #tpu.dot_dimension_numbers<[1], [0], [0], [1], [0, 0, 1, 1], [], []>} : vector<32x32xbf16>, vector<32x128xbf16>, vector<32x128xf32> -> vector<32x128xf32>
    %c0_9 = arith.constant 0 : index
    %c0_10 = arith.constant 0 : index
    %11 = vector.load %arg5[%c0_9, %c0_10] : memref<32x1xf32, #tpu.memory_space<vmem>>, vector<32x1xf32>
    %12 = vector.broadcast %11 : vector<32x1xf32> to vector<32x128xf32>
    %13 = arith.addf %10, %12 : vector<32x128xf32>
    %cst_11 = arith.constant 0.000000e+00 : f32
    %14 = vector.broadcast %cst_11 : f32 to vector<32x128xf32>
    %15 = arith.maximumf %13, %14 : vector<32x128xf32>
    %16 = arith.truncf %15 : vector<32x128xf32> to vector<32x128xbf16>
    %c0_12 = arith.constant 0 : index
    %c0_13 = arith.constant 0 : index
    %17 = vector.load %arg6[%c0_12, %c0_13] : memref<4x32xbf16, #tpu.memory_space<vmem>>, vector<4x32xbf16>
    %cst_14 = arith.constant dense<0.000000e+00> : vector<4x128xf32>
    %18 = tpu.matmul %17, %16, %cst_14 {dimension_numbers = #tpu.dot_dimension_numbers<[1], [0], [0], [1], [0, 0, 1, 1], [], []>} : vector<4x32xbf16>, vector<32x128xbf16>, vector<4x128xf32> -> vector<4x128xf32>
    %c0_15 = arith.constant 0 : index
    %c0_16 = arith.constant 0 : index
    %19 = vector.load %arg7[%c0_15, %c0_16] : memref<4x1xf32, #tpu.memory_space<vmem>>, vector<4x1xf32>
    %20 = vector.broadcast %19 : vector<4x1xf32> to vector<4x128xf32>
    %21 = arith.addf %18, %20 : vector<4x128xf32>
    %c0_17 = arith.constant 0 : index
    %c0_18 = arith.constant 0 : index
    %22 = vector.load %arg8[%c0_17, %c0_18] : memref<4x128xf32, #tpu.memory_space<vmem>>, vector<4x128xf32>
    tpu.vector_store %arg8[%c0_17, %c0_18], %21 {strides = array<i32>} : memref<4x128xf32, #tpu.memory_space<vmem>>, vector<4x128xf32>,
    return
  }
  func.func @transform_0(%arg0: i32) -> (i32, i32) {
    %c0_i32 = arith.constant 0 : i32
    %c0_i32_0 = arith.constant 0 : i32
    return %c0_i32, %arg0 : i32, i32
  }
  func.func @transform_1(%arg0: i32) -> (i32, i32) {
    %c0_i32 = arith.constant 0 : i32
    %c0_i32_0 = arith.constant 0 : i32
    %c0_i32_1 = arith.constant 0 : i32
    return %c0_i32, %c0_i32_0 : i32, i32
  }
  func.func @transform_2(%arg0: i32) -> (i32, i32) {
    %c0_i32 = arith.constant 0 : i32
    %c0_i32_0 = arith.constant 0 : i32
    %c0_i32_1 = arith.constant 0 : i32
    return %c0_i32, %c0_i32_0 : i32, i32
  }
  func.func @transform_3(%arg0: i32) -> (i32, i32) {
    %c0_i32 = arith.constant 0 : i32
    %c0_i32_0 = arith.constant 0 : i32
    %c0_i32_1 = arith.constant 0 : i32
    return %c0_i32, %c0_i32_0 : i32, i32
  }
  func.func @transform_4(%arg0: i32) -> (i32, i32) {
    %c0_i32 = arith.constant 0 : i32
    %c0_i32_0 = arith.constant 0 : i32
    %c0_i32_1 = arith.constant 0 : i32
    return %c0_i32, %c0_i32_0 : i32, i32
  }
  func.func @transform_5(%arg0: i32) -> (i32, i32) {
    %c0_i32 = arith.constant 0 : i32
    %c0_i32_0 = arith.constant 0 : i32
    %c0_i32_1 = arith.constant 0 : i32
    return %c0_i32, %c0_i32_0 : i32, i32
  }
  func.func @transform_6(%arg0: i32) -> (i32, i32) {
    %c0_i32 = arith.constant 0 : i32
    %c0_i32_0 = arith.constant 0 : i32
    %c0_i32_1 = arith.constant 0 : i32
    return %c0_i32, %c0_i32_0 : i32, i32
  }
  func.func @transform_7(%arg0: i32) -> (i32, i32) {
    %c0_i32 = arith.constant 0 : i32
    %c0_i32_0 = arith.constant 0 : i32
    return %c0_i32, %arg0 : i32, i32
  }
}

</mosaic_0001>

<llo_original>
// kernel: _lambda_.1
$region0: #{_lambda_.1}
  #allocation0 [shape = 'u32[]', space=smem, size = 0x4, offset = 0x4, fixed_abs, tag = 'smem constant byte address 0x4 - core index']
  #allocation1 [shape = 'u32[144,128]{1,0:T(1,128)}', space=vmem, size = 0x12000, scoped, tag = 'internal scratch']
  %s0 = inlined_call_operand.vmem [shape: bf16[16,128], index: 0, kind: input, shape index: {}]
  %s1 = inlined_call_operand.hbm [shape: bf16[32,16], index: 1, kind: input, shape index: {}]
  %s2 = inlined_call_operand.hbm [shape: f32[32,1], index: 2, kind: input, shape index: {}]
  %s3 = inlined_call_operand.hbm [shape: bf16[32,32], index: 3, kind: input, shape index: {}]
  %s4 = inlined_call_operand.vmem [shape: f32[32,1], index: 4, kind: input, shape index: {}]
  %s5 = inlined_call_operand.vmem [shape: bf16[4,32], index: 5, kind: input, shape index: {}]
  %s6 = inlined_call_operand.vmem [shape: f32[4,1], index: 6, kind: input, shape index: {}]
  %s7 = inlined_call_operand.vmem [shape: f32[4,128], index: 7, kind: output, shape index: {}]
  %s8 = sld [smem:[#allocation0]]
  $region50: #{_lambda_.1} parent=0
    _
  %s10 = ssub.s32 1, %s8
  %s11 = scalar_select 0, %s10, %s8
  $region1: #{_lambda_.1} parent=0
    #allocation2 [shape = 'u8[8192]{0}', space=vmem, size = 0x2000, scoped, tag = 'input window, operand 1, single buffered']
    #allocation3 [shape = 's32[1]{0}', space=sflag, size = 0x4, scoped, tag = 'scoped memory for _lambda_.1']
    #allocation4 [shape = 'u8[16384]{0}', space=vmem, size = 0x4000, scoped, tag = 'input window, operand 2, single buffered']
    #allocation5 [shape = 's32[1]{0}', space=sflag, size = 0x4, scoped, tag = 'scoped memory for _lambda_.1']
    #allocation6 [shape = 'u8[8192]{0}', space=vmem, size = 0x2000, scoped, tag = 'input window, operand 3, single buffered']
    %12 = vsyncpa [#allocation3], 0
    %13 = vsyncpa [#allocation5], 0
    // Predicated region
    $region2: #{_lambda_.1} parent=1 // pred_check
      _
    $region3: #{_lambda_.1} parent=1 // pred_check_branch
      %15 = sbr.rel (0) target = $region5
    $region4: #{_lambda_.1} parent=1 // pred_region
      _
    $region5: #{_lambda_.1} parent=1 // pred_fallthru
      _
    // Predicated region
    $region6: #{_lambda_.1} parent=1 // pred_check
      _
    $region7: #{_lambda_.1} parent=1 // pred_check_branch
      %17 = sbr.rel (0) target = $region9
    $region8: #{_lambda_.1} parent=1 // pred_region
      %s19 = ssub.s32 256, 256
      %20 = vsyncadd [#allocation3], %s19
      %s21 = sshll.u32 [#allocation2], 4
      %s22 = int_to_ptr.vmem [resolvable:$true] %s21
      %27 = dma.hbm_to_vmem [thread:$0]  %s1, 256, %s22, [#allocation3], 64, 64, 4
    $region9: #{_lambda_.1} parent=1 // pred_fallthru
      _
    // Predicated region
    $region10: #{_lambda_.1} parent=1 // pred_check
      _
    $region11: #{_lambda_.1} parent=1 // pred_check_branch
      %29 = sbr.rel (0) target = $region13
    $region12: #{_lambda_.1} parent=1 // pred_region
      %s31 = ssub.s32 512, 512
      %32 = vsyncadd [#allocation5], %s31
      %s33 = sshll.u32 [#allocation4], 4
      %s34 = int_to_ptr.vmem [resolvable:$true] %s33
      %39 = dma.hbm_to_vmem [thread:$0]  %s2, 512, %s34, [#allocation5], 128, 128, 8
    $region13: #{_lambda_.1} parent=1 // pred_fallthru
      _
    // Predicated region
    $region14: #{_lambda_.1} parent=1 // pred_check
      _
    $region15: #{_lambda_.1} parent=1 // pred_check_branch
      %41 = sbr.rel (0) target = $region17
    $region16: #{_lambda_.1} parent=1 // pred_region
      %s43 = ssub.s32 256, 256
      %44 = vsyncadd [#allocation5], %s43
      %s45 = sshll.u32 [#allocation6], 4
      %s46 = int_to_ptr.vmem [resolvable:$true] %s45
      %51 = dma.hbm_to_vmem [thread:$0]  %s3, 256, %s46, [#allocation5], 64, 64, 4
    $region17: #{_lambda_.1} parent=1 // pred_fallthru
      _
    // Predicated region
    $region18: #{_lambda_.1} parent=1 // pred_check
      _
    $region19: #{_lambda_.1} parent=1 // pred_check_branch
      %53 = sbr.rel (0) target = $region21
    $region20: #{_lambda_.1} parent=1 // pred_region
      _
    $region21: #{_lambda_.1} parent=1 // pred_fallthru
      _
    // Predicated region
    $region22: #{_lambda_.1} parent=1 // pred_check
      _
    $region23: #{_lambda_.1} parent=1 // pred_check_branch
      %55 = sbr.rel (0) target = $region25
    $region24: #{_lambda_.1} parent=1 // pred_region
      _
    $region25: #{_lambda_.1} parent=1 // pred_fallthru
      _
    // Predicated region
    $region26: #{_lambda_.1} parent=1 // pred_check
      _
    $region27: #{_lambda_.1} parent=1 // pred_check_branch
      %57 = sbr.rel (0) target = $region29
    $region28: #{_lambda_.1} parent=1 // pred_region
      _
    $region29: #{_lambda_.1} parent=1 // pred_fallthru
      _
    // Predicated region
    $region30: #{_lambda_.1} parent=1 // pred_check
      _
    $region31: #{_lambda_.1} parent=1 // pred_check_branch
      %59 = sbr.rel (0) target = $region33
    $region32: #{_lambda_.1} parent=1 // pred_region
      %60 = dma.done [#allocation3], 256
    $region33: #{_lambda_.1} parent=1 // pred_fallthru
      _
    // Predicated region
    $region34: #{_lambda_.1} parent=1 // pred_check
      _
    $region35: #{_lambda_.1} parent=1 // pred_check_branch
      %62 = sbr.rel (0) target = $region37
    $region36: #{_lambda_.1} parent=1 // pred_region
      %63 = dma.done [#allocation5], 512
    $region37: #{_lambda_.1} parent=1 // pred_fallthru
      _
    // Predicated region
    $region38: #{_lambda_.1} parent=1 // pred_check
      _
    $region39: #{_lambda_.1} parent=1 // pred_check_branch
      %65 = sbr.rel (0) target = $region41
    $region40: #{_lambda_.1} parent=1 // pred_region
      %66 = dma.done [#allocation5], 256
    $region41: #{_lambda_.1} parent=1 // pred_fallthru
      _
    %v68 = vld [vmem:[%s0] sm:$0xf]
    %v69 = vld [vmem:[%s0 + $0x4] sm:$0xf]
    %v70 = vld [vmem:[#allocation2] sm:$0xf]
    %v71 = vld [vmem:[#allocation2 + $0x4] sm:$0xf]
    %v72 = vld [vmem:[#allocation2 + $0x8] sm:$0xf]
    %v73 = vld [vmem:[#allocation2 + $0xc] sm:$0xf]
    %v74 = vld [vmem:[#allocation4] sm:$0xff]
    %v75 = vld [vmem:[#allocation4 + $0x8] sm:$0xff]
    %v76 = vld [vmem:[#allocation4 + $0x10] sm:$0xff]
    %v77 = vld [vmem:[#allocation4 + $0x18] sm:$0xff]
    %79 = vset.pattern.permute.xlu0 0
    %80 = vperm.xlu0 %79, %v74
    %v81 = vpop.permute.xlu0 %80
    %84 = vset.pattern.permute.xlu0 0
    %85 = vperm.xlu0 %84, %v75
    %v86 = vpop.permute.xlu0 %85
    %89 = vset.pattern.permute.xlu0 0
    %90 = vperm.xlu0 %89, %v76
    %v91 = vpop.permute.xlu0 %90
    %94 = vset.pattern.permute.xlu0 0
    %95 = vperm.xlu0 %94, %v77
    %v96 = vpop.permute.xlu0 %95
    %v102 = vunpack.c.l.b16 %v70
    %v103 = vunpack.c.l.b16 %v71
    %v104 = vunpack.c.l.b16 %v72
    %v105 = vunpack.c.l.b16 %v73
    %v106 = vpack.c.b16 %v103, %v102
    %v107 = vpack.c.b16 %v105, %v104
    %v110 = vunpack.c.l.b16 %v68
    %v111 = vunpack.c.l.b16 %v69
    %v112 = vpack.c.b16 %v111, %v110
    %vm114 = vcmask 130048
    %v116 = vsel %vm114, %v106, 0
    %v119 = vsel %vm114, %v107, 0
    %121 = vmatprep.subr.bf16.mxu0 0
    %122 = vmatpush1.bf16.msra.mxu0 0
    %123 = vmatprep.subr.bf16.mxu0 0
    %124 = vmatpush1.bf16.msra.mxu0 0
    %125 = vmatprep.subr.bf16.mxu0 0
    %126 = vmatpush1.bf16.msra.mxu0 0
    %127 = vmatprep.subr.bf16.mxu0 0
    %128 = vmatpush1.bf16.msra.mxu0 0
    %129 = vmatprep.subr.bf16.mxu0 0
    %130 = vmatpush1.bf16.msra.mxu0 0
    %131 = vmatprep.subr.bf16.mxu0 0
    %132 = vmatpush1.bf16.msra.mxu0 0
    %133 = vmatprep.subr.bf16.mxu0 0
    %134 = vmatpush1.bf16.msra.mxu0 0
    %135 = vmatprep.subr.bf16.mxu0 0
    %136 = vmatpush1.bf16.msra.mxu0 %v112
    %137 = vmatprep.subr.bf16.mxu0 0
    %138 = vmatpush2.bf16.msra.mxu0 0
    %139 = vmatprep.subr.bf16.mxu0 0
    %140 = vmatpush2.bf16.msra.mxu0 0
    %141 = vmatprep.subr.bf16.mxu0 0
    %142 = vmatpush2.bf16.msra.mxu0 0
    %143 = vmatprep.subr.bf16.mxu0 0
    %144 = vmatpush2.bf16.msra.mxu0 0
    %145 = vmatprep.subr.bf16.mxu0 0
    %146 = vmatpush2.bf16.msra.mxu0 0
    %147 = vmatprep.subr.bf16.mxu0 0
    %148 = vmatpush2.bf16.msra.mxu0 0
    %149 = vmatprep.subr.bf16.mxu0 0
    %150 = vmatpush2.bf16.msra.mxu0 0
    %151 = vmatprep.subr.bf16.mxu0 0
    %152 = vmatpush2.bf16.msra.mxu0 0
    %153 = vmatprep.mubr.bf16.mxu0 0
    %154 = vmatmul.mubr.bf16.gmra.mxu0 %v116
    %v155 = vpop.f32.mrf.mxu0
    %v156 = vadd.f32 %v81, %v155
    %v157 = vpop.f32.mrf.mxu0
    %v158 = vpop.f32.mrf.mxu0
    %v159 = vadd.f32 %v86, %v158
    %v160 = vpop.f32.mrf.mxu0
    %161 = vmatprep.mubr.bf16.mxu0 0
    %162 = vmatmul.mubr.bf16.gmra.mxu0 %v119
    %v163 = vpop.f32.mrf.mxu0
    %v164 = vadd.f32 %v91, %v163
    %v165 = vpop.f32.mrf.mxu0
    %v166 = vpop.f32.mrf.mxu0
    %v167 = vadd.f32 %v96, %v166
    %v168 = vpop.f32.mrf.mxu0
    %169 = vdwg.mxu0
    %v170 = vmax.f32 %v156, 0.0
    %v171 = vmax.f32 %v159, 0.0
    %v172 = vmax.f32 %v164, 0.0
    %v173 = vmax.f32 %v167, 0.0
    %v174 = vpack.c.bf16 %v171, %v170
    %v175 = vpack.c.bf16 %v173, %v172
    %v176 = vld [vmem:[#allocation6] sm:$0xf]
    %v177 = vld [vmem:[#allocation6 + $0x4] sm:$0xf]
    %v178 = vld [vmem:[#allocation6 + $0x8] sm:$0xf]
    %v179 = vld [vmem:[#allocation6 + $0xc] sm:$0xf]
    %v180 = vld [vmem:[%s4] sm:$0xff]
    %v181 = vld [vmem:[%s4 + $0x8] sm:$0xff]
    %v182 = vld [vmem:[%s4 + $0x10] sm:$0xff]
    %v183 = vld [vmem:[%s4 + $0x18] sm:$0xff]
    %185 = vset.pattern.permute.xlu0 0
    %186 = vperm.xlu0 %185, %v180
    %v187 = vpop.permute.xlu0 %186
    %190 = vset.pattern.permute.xlu0 0
    %191 = vperm.xlu0 %190, %v181
    %v192 = vpop.permute.xlu0 %191
    %195 = vset.pattern.permute.xlu0 0
    %196 = vperm.xlu0 %195, %v182
    %v197 = vpop.permute.xlu0 %196
    %200 = vset.pattern.permute.xlu0 0
    %201 = vperm.xlu0 %200, %v183
    %v202 = vpop.permute.xlu0 %201
    %v208 = vunpack.c.l.b16 %v176
    %v209 = vunpack.c.l.b16 %v177
    %v210 = vunpack.c.l.b16 %v178
    %v211 = vunpack.c.l.b16 %v179
    %v212 = vpack.c.b16 %v209, %v208
    %v213 = vpack.c.b16 %v211, %v210
    %vm214 = vcmask 261120
    %v216 = vsel %vm214, %v212, 0
    %v219 = vsel %vm214, %v213, 0
    %221 = vmatprep.subr.bf16.mxu0 0
    %222 = vmatpush1.bf16.msra.mxu0 0
    %223 = vmatprep.subr.bf16.mxu0 0
    %224 = vmatpush1.bf16.msra.mxu0 0
    %225 = vmatprep.subr.bf16.mxu0 0
    %226 = vmatpush1.bf16.msra.mxu0 0
    %227 = vmatprep.subr.bf16.mxu0 0
    %228 = vmatpush1.bf16.msra.mxu0 0
    %229 = vmatprep.subr.bf16.mxu0 0
    %230 = vmatpush1.bf16.msra.mxu0 0
    %231 = vmatprep.subr.bf16.mxu0 0
    %232 = vmatpush1.bf16.msra.mxu0 0
    %233 = vmatprep.subr.bf16.mxu0 0
    %234 = vmatpush1.bf16.msra.mxu0 %v175
    %235 = vmatprep.subr.bf16.mxu0 0
    %236 = vmatpush1.bf16.msra.mxu0 %v174
    %237 = vmatprep.subr.bf16.mxu0 0
    %238 = vmatpush2.bf16.msra.mxu0 0
    %239 = vmatprep.subr.bf16.mxu0 0
    %240 = vmatpush2.bf16.msra.mxu0 0
    %241 = vmatprep.subr.bf16.mxu0 0
    %242 = vmatpush2.bf16.msra.mxu0 0
    %243 = vmatprep.subr.bf16.mxu0 0
    %244 = vmatpush2.bf16.msra.mxu0 0
    %245 = vmatprep.subr.bf16.mxu0 0
    %246 = vmatpush2.bf16.msra.mxu0 0
    %247 = vmatprep.subr.bf16.mxu0 0
    %248 = vmatpush2.bf16.msra.mxu0 0
    %249 = vmatprep.subr.bf16.mxu0 0
    %250 = vmatpush2.bf16.msra.mxu0 0
    %251 = vmatprep.subr.bf16.mxu0 0
    %252 = vmatpush2.bf16.msra.mxu0 0
    %253 = vmatprep.mubr.bf16.mxu0 0
    %254 = vmatmul.mubr.bf16.gmra.mxu0 %v216
    %v255 = vpop.f32.mrf.mxu0
    %v256 = vadd.f32 %v187, %v255
    %v257 = vpop.f32.mrf.mxu0
    %v258 = vpop.f32.mrf.mxu0
    %v259 = vadd.f32 %v192, %v258
    %v260 = vpop.f32.mrf.mxu0
    %261 = vmatprep.mubr.bf16.mxu0 0
    %262 = vmatmul.mubr.bf16.gmra.mxu0 %v219
    %v263 = vpop.f32.mrf.mxu0
    %v264 = vadd.f32 %v197, %v263
    %v265 = vpop.f32.mrf.mxu0
    %v266 = vpop.f32.mrf.mxu0
    %v267 = vadd.f32 %v202, %v266
    %v268 = vpop.f32.mrf.mxu0
    %269 = vdwg.mxu0
    %v270 = vmax.f32 %v256, 0.0
    %v271 = vmax.f32 %v259, 0.0
    %v272 = vmax.f32 %v264, 0.0
    %v273 = vmax.f32 %v267, 0.0
    %v274 = vpack.c.bf16 %v271, %v270
    %v275 = vpack.c.bf16 %v273, %v272
    %v276 = vld [vmem:[%s5] sm:$0x3]
    %v277 = vld [vmem:[%s6] sm:$0xf]
    %279 = vset.pattern.permute.xlu0 0
    %280 = vperm.xlu0 %279, %v277
    %v281 = vpop.permute.xlu0 %280
    %v284 = vsel %vm214, %v276, 0
    %286 = vmatprep.subr.bf16.mxu0 0
    %287 = vmatpush1.bf16.msra.mxu0 0
    %288 = vmatprep.subr.bf16.mxu0 0
    %289 = vmatpush1.bf16.msra.mxu0 0
    %290 = vmatprep.subr.bf16.mxu0 0
    %291 = vmatpush1.bf16.msra.mxu0 0
    %292 = vmatprep.subr.bf16.mxu0 0
    %293 = vmatpush1.bf16.msra.mxu0 0
    %294 = vmatprep.subr.bf16.mxu0 0
    %295 = vmatpush1.bf16.msra.mxu0 0
    %296 = vmatprep.subr.bf16.mxu0 0
    %297 = vmatpush1.bf16.msra.mxu0 0
    %298 = vmatprep.subr.bf16.mxu0 0
    %299 = vmatpush1.bf16.msra.mxu0 %v275
    %300 = vmatprep.subr.bf16.mxu0 0
    %301 = vmatpush1.bf16.msra.mxu0 %v274
    %302 = vmatprep.subr.bf16.mxu0 0
    %303 = vmatpush2.bf16.msra.mxu0 0
    %304 = vmatprep.subr.bf16.mxu0 0
    %305 = vmatpush2.bf16.msra.mxu0 0
    %306 = vmatprep.subr.bf16.mxu0 0
    %307 = vmatpush2.bf16.msra.mxu0 0
    %308 = vmatprep.subr.bf16.mxu0 0
    %309 = vmatpush2.bf16.msra.mxu0 0
    %310 = vmatprep.subr.bf16.mxu0 0
    %311 = vmatpush2.bf16.msra.mxu0 0
    %312 = vmatprep.subr.bf16.mxu0 0
    %313 = vmatpush2.bf16.msra.mxu0 0
    %314 = vmatprep.subr.bf16.mxu0 0
    %315 = vmatpush2.bf16.msra.mxu0 0
    %316 = vmatprep.subr.bf16.mxu0 0
    %317 = vmatpush2.bf16.msra.mxu0 0
    %318 = vmatprep.mubr.bf16.mxu0 0
    %319 = vmatmul.mubr.bf16.gmra.mxu0 %v284
    %v320 = vpop.f32.mrf.mxu0
    %v321 = vadd.f32 %v281, %v320
    %v322 = vpop.f32.mrf.mxu0
    %v323 = vpop.f32.mrf.mxu0
    %v324 = vpop.f32.mrf.mxu0
    %325 = vdwg.mxu0
    %326 = vst [vmem:[%s7] sm:$0xf] %v321
    // Predicated region
    $region42: #{_lambda_.1} parent=1 // pred_check
      _
    $region43: #{_lambda_.1} parent=1 // pred_check_branch
      %328 = sbr.rel (0) target = $region45
    $region44: #{_lambda_.1} parent=1 // pred_region
      _
    $region45: #{_lambda_.1} parent=1 // pred_fallthru
      _
    // Predicated region
    $region46: #{_lambda_.1} parent=1 // pred_check
      _
    $region47: #{_lambda_.1} parent=1 // pred_check_branch
      %330 = sbr.rel (0) target = $region49
    $region48: #{_lambda_.1} parent=1 // pred_region
      _
    $region49: #{_lambda_.1} parent=1 // pred_fallthru
      _
    %331 = vsyncpa [#allocation3], 1
    %332 = vsyncpa [#allocation5], 1

</llo_original>
